<compile_context>
chip_gen: v7x
topology: tpu7x:2x2x1
jax: 0.10.0
libtpu: 0.0.40
codegen_flags: <defaults>
</compile_context>

<pallas_src>
import functools
import math

import jax
import jax.numpy as jnp
from jax.experimental import pallas as pl
from jax.experimental.pallas import tpu as pltpu


def _discriminator_kernel(features_ref, tmp_ref, out_ref):
    # features_ref: [TN, H] tile of node embeddings (streamed, double-buffered)
    # tmp_ref:      [1, H]  precomputed W @ summary (same block every step -> resident)
    # out_ref:      [TN, 1] scores for this tile
    f = features_ref[...].astype(jnp.float32)
    t = tmp_ref[...].astype(jnp.float32)  # broadcasts over the TN rows
    # VPU multiply + XLU lane reduction; MXU would use 1/256 output columns here.
    out_ref[...] = jnp.sum(f * t, axis=-1, keepdims=True).astype(out_ref.dtype)


@functools.partial(jax.jit, static_argnames=("block_n",))
def discriminator_forward(features, weight, summary, *, block_n=1024):
    """features: [N, H], weight: [H, H], summary: [H]  ->  [N].

    Matches torch: features @ (weight @ summary).
    """
    n, h = features.shape
    out_dtype = jnp.promote_types(
        features.dtype, jnp.promote_types(weight.dtype, summary.dtype)
    )

    # Hoisted tiny matvec (done once, outside the per-tile streaming path).
    tmp_row = jnp.matmul(
        weight.astype(jnp.float32), summary.astype(jnp.float32)
    ).reshape(1, h)

    # Row-tile size.  A single tile equal to the full array is always legal;
    # when tiling, TN must be a multiple of 8 (sublanes).  block_n=1024:
    # 2 buffers x TN x H x 4B stays well under VMEM even on v7x for typical H.
    tn = n if n <= block_n else block_n
    grid = (pl.cdiv(n, tn),)  # partial last block handled by Pallas (no HBM pad copy)

    out = pl.pallas_call(
        _discriminator_kernel,
        out_shape=jax.ShapeDtypeStruct((n, 1), out_dtype),
        grid_spec=pl.GridSpec(
            grid=grid,
            in_specs=[
                pl.BlockSpec((tn, h), lambda i: (i, 0)),   # streamed features tile
                pl.BlockSpec((1, h), lambda i: (0, 0)),    # resident tmp row
            ],
            out_specs=pl.BlockSpec((tn, 1), lambda i: (i, 0)),
        ),
        compiler_params=pltpu.CompilerParams(
            dimension_semantics=("parallel",),  # megacore sharding on v7x
        ),
    )(features, tmp_row)
    # TODO(synk): for production sizes, optionally stream features as bf16
    # (cast in the wrapper) for ~2x HBM bandwidth; accumulation stays f32.
    return out[:, 0]


def init_discriminator_weight(key, n_hidden, dtype=jnp.float32):
    # Matches reset_parameters(): uniform(-1/sqrt(n_hidden), 1/sqrt(n_hidden))
    bound = 1.0 / math.sqrt(n_hidden)
    return jax.random.uniform(
        key, (n_hidden, n_hidden), dtype=dtype, minval=-bound, maxval=bound
    )


if __name__ == "__main__":
    key = jax.random.PRNGKey(0)
    k_w, k_f, k_s, k_f2 = jax.random.split(key, 4)

    # Small shapes consistent with the module.
    n_hidden = 32   # H
    n_nodes = 16    # N (single-tile path)

    weight = init_discriminator_weight(k_w, n_hidden)
    features = jax.random.normal(k_f, (n_nodes, n_hidden), dtype=jnp.float32)
    summary = jax.random.normal(k_s, (n_hidden,), dtype=jnp.float32)

    out = discriminator_forward(features, weight, summary)
    out = jax.block_until_ready(out)
    ref = features @ (weight @ summary)
    assert out.shape == (n_nodes,)
    assert jnp.allclose(out, ref, atol=1e-4, rtol=1e-4)

    # Exercise the tiled path with a partial last block (N not a multiple of
    # the tile size) -- no padding copy is made.
    n_nodes2 = 500
    features2 = jax.random.normal(k_f2, (n_nodes2, n_hidden), dtype=jnp.float32)
    out2 = discriminator_forward(features2, weight, summary, block_n=128)
    out2 = jax.block_until_ready(out2)
    ref2 = features2 @ (weight @ summary)
    assert out2.shape == (n_nodes2,)
    assert jnp.allclose(out2, ref2, atol=1e-4, rtol=1e-4)

    print("KERNEL_OK")
</pallas_src>

<mosaic_0001>
module attributes {stable_mosaic.version = 11 : i64} {
  func.func @_discriminator_kernel(%arg0: i32, %arg1: memref<16x32xf32, #tpu.memory_space<vmem>>, %arg2: memref<1x32xf32, #tpu.memory_space<vmem>>, %arg3: memref<16x1xf32, #tpu.memory_space<vmem>>) attributes {dimension_semantics = [#tpu.dimension_semantics<parallel>], iteration_bounds = array<i64: 1>, scalar_prefetch = 0 : i64, scratch_operands = 0 : i64, tpu.core_type = #tpu.core_type<tc>, window_params = [{transform_indices = @transform_0, window_bounds = array<i64: 16, 32>}, {pipeline_mode = #tpu.pipeline_mode<synchronous>, transform_indices = @transform_1, window_bounds = array<i64: 1, 32>}, {transform_indices = @transform_2, window_bounds = array<i64: 16, 1>}]} {
    %c0 = arith.constant 0 : index
    %c0_0 = arith.constant 0 : index
    %0 = vector.load %arg1[%c0, %c0_0] : memref<16x32xf32, #tpu.memory_space<vmem>>, vector<16x32xf32>
    %c0_1 = arith.constant 0 : index
    %c0_2 = arith.constant 0 : index
    %1 = vector.load %arg2[%c0_1, %c0_2] : memref<1x32xf32, #tpu.memory_space<vmem>>, vector<1x32xf32>
    %2 = vector.broadcast %1 : vector<1x32xf32> to vector<16x32xf32>
    %3 = arith.mulf %0, %2 : vector<16x32xf32>
    %cst = arith.constant dense<0.000000e+00> : vector<16xf32>
    %4 = vector.multi_reduction <add>, %3, %cst [1] : vector<16x32xf32> to vector<16xf32>
    %5 = vector.shape_cast %4 : vector<16xf32> to vector<16x1xf32>
    %c0_3 = arith.constant 0 : index
    %c0_4 = arith.constant 0 : index
    %6 = vector.load %arg3[%c0_3, %c0_4] : memref<16x1xf32, #tpu.memory_space<vmem>>, vector<16x1xf32>
    tpu.vector_store %arg3[%c0_3, %c0_4], %5 {strides = array<i32>} : memref<16x1xf32, #tpu.memory_space<vmem>>, vector<16x1xf32>,
    return
  }
  func.func @transform_0(%arg0: i32) -> (i32, i32) {
    %c0_i32 = arith.constant 0 : i32
    %c0_i32_0 = arith.constant 0 : i32
    return %arg0, %c0_i32 : i32, i32
  }
  func.func @transform_1(%arg0: i32) -> (i32, i32) {
    %c0_i32 = arith.constant 0 : i32
    %c0_i32_0 = arith.constant 0 : i32
    %c0_i32_1 = arith.constant 0 : i32
    return %c0_i32, %c0_i32_0 : i32, i32
  }
  func.func @transform_2(%arg0: i32) -> (i32, i32) {
    %c0_i32 = arith.constant 0 : i32
    %c0_i32_0 = arith.constant 0 : i32
    return %arg0, %c0_i32 : i32, i32
  }
}

</mosaic_0001>

<llo_original>
// kernel: discriminator_forward.1
$region0: #{discriminator_forward.1}
  #allocation0 [shape = 'u32[]', space=smem, size = 0x4, offset = 0x4, fixed_abs, tag = 'smem constant byte address 0x4 - core index']
  #allocation1 [shape = 'u32[144,128]{1,0:T(1,128)}', space=vmem, size = 0x12000, scoped, tag = 'internal scratch']
  %s0 = inlined_call_operand.vmem [shape: f32[16,32], index: 0, kind: input, shape index: {}]
  %s1 = inlined_call_operand.vmem [shape: f32[1,32], index: 1, kind: input, shape index: {}]
  %s2 = inlined_call_operand.vmem [shape: f32[16,1], index: 2, kind: output, shape index: {}]
  %s3 = sld [smem:[#allocation0]]
  $region18: #{discriminator_forward.1} parent=0
    _
  %s5 = ssub.s32 1, %s3
  %s6 = scalar_select 0, %s5, %s3
  // Predicated region
  $region2: #{discriminator_forward.1} parent=0 // pred_check
    _
  $region3: #{discriminator_forward.1} parent=0 // pred_check_branch
    %8 = sbr.rel (0) target = $region5
  $region4: #{discriminator_forward.1} parent=0 // pred_region
    _
  $region5: #{discriminator_forward.1} parent=0 // pred_fallthru
    _
  // Predicated region
  $region6: #{discriminator_forward.1} parent=0 // pred_check
    _
  $region7: #{discriminator_forward.1} parent=0 // pred_check_branch
    %10 = sbr.rel (0) target = $region9
  $region8: #{discriminator_forward.1} parent=0 // pred_region
    _
  $region9: #{discriminator_forward.1} parent=0 // pred_fallthru
    _
  %v11 = vld [vmem:[%s0] sm:$0xff]
  %v12 = vld [vmem:[%s0 + $0x8] sm:$0xff]
  %v13 = vld [vmem:[%s1] sm:$0x1]
  %v15 = vlaneseq
  %v16 = vshrl.u32 %v15, 7
  %v17 = vsub.s32 0, %v16
  %v18 = vrot.slane %v13, %v17
  %v20 = vmul.f32 %v11, %v18
  %v21 = vmul.f32 %v12, %v18
  %vm22 = vcmask 261120
  %v23 = vsel %vm22, %v20, 0.0
  %24 = vadd.xlane.f32.xlu0 %v23
  %v25 = vpop.xlane.xlu0 %24
  %v26 = vsel %vm22, %v21, 0.0
  %27 = vadd.xlane.f32.xlu0 %v26
  %v28 = vpop.xlane.xlu0 %27
  %vm29 = vcmask 7168
  %30 = vst.msk [vmem:[%s2] sm:$0xff] %vm29, %v25
  %31 = vst.msk [vmem:[%s2 + $0x8] sm:$0xff] %vm29, %v28
  // Predicated region
  $region10: #{discriminator_forward.1} parent=0 // pred_check
    _
  $region11: #{discriminator_forward.1} parent=0 // pred_check_branch
    %33 = sbr.rel (0) target = $region13
  $region12: #{discriminator_forward.1} parent=0 // pred_region
    _
  $region13: #{discriminator_forward.1} parent=0 // pred_fallthru
    _
  // Predicated region
  $region14: #{discriminator_forward.1} parent=0 // pred_check
    _
  $region15: #{discriminator_forward.1} parent=0 // pred_check_branch
    %35 = sbr.rel (0) target = $region17
  $region16: #{discriminator_forward.1} parent=0 // pred_region
    _
  $region17: #{discriminator_forward.1} parent=0 // pred_fallthru
    _

</llo_original>
